<compile_context>
chip_gen: v7x
topology: tpu7x:2x2x1
jax: 0.10.0
libtpu: 0.0.40
codegen_flags: <defaults>
</compile_context>

<pallas_src>
import functools

import jax
import jax.numpy as jnp
from jax.experimental import pallas as pl
from jax.experimental.pallas import tpu as pltpu

LN_EPS = 1e-5


def _round_up(x, m):
    return ((x + m - 1) // m) * m


def _cfe_kernel(x_ref, gamma_ref, beta_ref, w_ref, b_ref, o_ref, *scratch,
                cache_xn, repack_g, precision):
    """One (row_tile x col_tile) block of LayerNorm -> Linear -> Tanh."""

    def _layernorm():
        x = x_ref[...].astype(jnp.float32)
        mean = jnp.mean(x, axis=-1, keepdims=True)
        xc = x - mean
        var = jnp.mean(xc * xc, axis=-1, keepdims=True)
        inv = jax.lax.rsqrt(var + LN_EPS)
        xn = (xc * inv * gamma_ref[...].astype(jnp.float32)
              + beta_ref[...].astype(jnp.float32))
        return xn.astype(w_ref.dtype)            # MXU operand dtype == weight dtype

    if cache_xn:
        # Column-tiled, row-outer grid: LN computed once per row tile (j == 0) and
        # reused for every weight column block (j axis is marked "arbitrary").
        xn_ref = scratch[0]

        @pl.when(pl.program_id(1) == 0)
        def _():
            xn_ref[...] = _layernorm()

        xn = xn_ref[...]
    else:
        xn = _layernorm()

    y = jnp.dot(xn, w_ref[...], preferred_element_type=jnp.float32,
                precision=precision)
    y = y + b_ref[...].astype(jnp.float32)

    # Tanh; for bf16 outputs run the EUP in bf16 (native/2x rate on v6e/v7x).
    if o_ref.dtype == jnp.bfloat16:
        out = jnp.tanh(y.astype(jnp.bfloat16))
    else:
        out = jnp.tanh(y).astype(o_ref.dtype)

    if repack_g > 1:
        # Lane-dense output repack: (TM, d_out) -> (TM/g, g*d_out == 128) so stores are
        # full-width vst instead of masked vst.msk. The wrapper's reshape back to
        # (N, d_out) is free (identical row-major bytes).
        tm, dn = out.shape
        out = out.reshape(tm // repack_g, dn * repack_g)

    # Dropout is identity at inference time.
    # TODO(synk): training-mode dropout via pltpu.prng_seed / pltpu.prng_random_bits.
    o_ref[...] = out


def _run(x2, gamma2, beta2, weight, bias2, *, row_tile, col_tile, fancy):
    n_rows, d_in = x2.shape
    d_out = weight.shape[1]
    out_dtype = x2.dtype

    x_it = x2.dtype.itemsize
    w_it = weight.dtype.itemsize
    o_it = x2.dtype.itemsize

    # --- per-generation VMEM budget (v5e/v6e ~128 MiB, v7x 64 MiB per TensorCore) ---
    try:
        vmem_cap = int(pltpu.get_tpu_info().vmem_capacity_bytes)
    except Exception:
        vmem_cap = 64 * 1024 * 1024              # conservative (v7x) fallback
    budget = vmem_cap // 2                       # ~50% headroom

    # --- column tile: byte-budgeted so the resident weight block fits every gen ---
    if col_tile is None:
        w_block_budget = budget // 2
        max_cols = max(1, w_block_budget // (2 * d_in * w_it))
        col_tile = d_out if max_cols >= d_out else max(128, (max_cols // 128) * 128)
    col_tile = min(col_tile, d_out)
    col_steps = pl.cdiv(d_out, col_tile)

    # --- grid order: fetch the larger of {weight, x} from HBM only once ---
    x_bytes = n_rows * d_in * x_it
    w_bytes = d_in * d_out * w_it
    row_outer = (col_steps == 1) or (x_bytes >= w_bytes)
    cache_xn = fancy and row_outer and col_steps > 1

    # --- row tile: byte-budgeted, targeting the 256-512 row HBM-roofline plateau ---
    w_bufs = 1 if (fancy and col_steps == 1) else 2
    w_resident = w_bufs * d_in * col_tile * w_it
    per_row = (2 * d_in * x_it + 2 * col_tile * o_it
               + (d_in * w_it if cache_xn else 0))
    if row_tile is None:
        row_budget = max(8, (budget - w_resident) // per_row)
        row_tile = min(512, row_budget, _round_up(n_rows, 8))
        row_tile = max(8, (row_tile // 8) * 8)
        # Keep >= 4 row steps on large inputs so both v7x TensorCores still pipeline.
        if pl.cdiv(n_rows, row_tile) < 4 and n_rows >= 4 * 64:
            row_tile = max(64, _round_up(pl.cdiv(n_rows, 4), 8))
    row_tile = max(8, _round_up(int(row_tile), 8))
    row_tile = min(row_tile, _round_up(n_rows, 8))

    # --- lane-dense output repack for small d_out (avoid masked partial stores) ---
    g = 1
    if fancy and col_steps == 1 and d_out < 128 and 128 % d_out == 0:
        gg = 128 // d_out
        if n_rows % gg == 0:
            g = gg
            if n_rows // g < 8 or row_tile >= n_rows:
                row_tile = n_rows            # single block == full array dims
            else:
                row_tile = _round_up(row_tile, 8 * g)

    row_steps = pl.cdiv(n_rows, row_tile)

    if row_outer:
        grid = (row_steps, col_steps)
        x_map = lambda i, j: (i, 0)
        p_map = lambda i, j: (0, 0)
        w_map = lambda i, j: (0, j)
        o_map = lambda i, j: (i, j)
        dims = ("parallel", "arbitrary" if cache_xn else "parallel")
    else:
        grid = (col_steps, row_steps)
        x_map = lambda j, i: (i, 0)
        p_map = lambda j, i: (0, 0)
        w_map = lambda j, i: (0, j)
        o_map = lambda j, i: (i, j)
        dims = ("parallel", "parallel")

    def _spec(shape, imap, invariant):
        if fancy and invariant:
            # Grid-invariant block: single-buffer it (halves its VMEM footprint).
            return pl.BlockSpec(shape, imap, pipeline_mode=pl.Buffered(1))
        return pl.BlockSpec(shape, imap)

    in_specs = [
        _spec((row_tile, d_in), x_map, False),            # x rows
        _spec((1, d_in), p_map, True),                    # gamma
        _spec((1, d_in), p_map, True),                    # beta
        _spec((d_in, col_tile), w_map, col_steps == 1),   # weight block
        _spec((1, col_tile), w_map, col_steps == 1),      # bias block
    ]

    if g > 1:
        out_shape = jax.ShapeDtypeStruct((n_rows // g, d_out * g), out_dtype)
        out_spec = pl.BlockSpec((row_tile // g, d_out * g), o_map)
    else:
        out_shape = jax.ShapeDtypeStruct((n_rows, d_out), out_dtype)
        out_spec = pl.BlockSpec((row_tile, col_tile), o_map)

    scratch_shapes = []
    if cache_xn:
        scratch_shapes.append(pltpu.VMEM((row_tile, d_in), weight.dtype))

    # f32 weights: explicit HIGHEST precision so the matmul matches an fp32 reference
    # (memory-bound op, so the extra MXU passes stay hidden under DMA).
    precision = (jax.lax.Precision.HIGHEST
                 if (fancy and weight.dtype == jnp.float32) else None)

    # Scoped-VMEM limit from the real tile footprint (defaults are too small for
    # 512-row tiles with large d_in / large resident weight blocks).
    vmem_need = (2 * row_tile * d_in * x_it
                 + w_resident
                 + 2 * row_tile * col_tile * o_it
                 + 4 * d_in * gamma2.dtype.itemsize
                 + 2 * col_tile * bias2.dtype.itemsize
                 + (row_tile * d_in * w_it if cache_xn else 0))
    vmem_limit = int(min(vmem_cap, max(int(vmem_need * 1.5) + (2 << 20), 32 << 20)))

    # HBM traffic estimate accounting for operand re-reads under the chosen order.
    w_reads = row_steps if (row_outer and col_steps > 1) else 1
    x_reads = 1 if row_outer else col_steps
    cost = pl.CostEstimate(
        flops=2 * n_rows * d_in * d_out + 8 * n_rows * d_in,
        transcendentals=n_rows * d_out,
        bytes_accessed=int(x_reads * x_bytes + w_reads * w_bytes
                           + n_rows * d_out * o_it + (2 * d_in + d_out) * 4))

    kernel = functools.partial(_cfe_kernel, cache_xn=cache_xn, repack_g=g,
                               precision=precision)

    out = pl.pallas_call(
        kernel,
        out_shape=out_shape,
        grid=grid,
        in_specs=in_specs,
        out_specs=out_spec,
        scratch_shapes=tuple(scratch_shapes),
        compiler_params=pltpu.CompilerParams(
            dimension_semantics=dims, vmem_limit_bytes=vmem_limit),
        cost_estimate=cost,
    )(x2, gamma2, beta2, weight, bias2)

    if g > 1:
        out = out.reshape(n_rows, d_out)     # same row-major bytes; no data movement
    return out


def common_feature_extractor(x, gamma, beta, weight, bias, *,
                             row_tile=None, col_tile=None, matmul_dtype=None):
    """x: [..., D_in]; weight: [D_in, D_out] (transposed Linear weight). Returns [..., D_out].

    matmul_dtype: optionally pre-cast the weight (e.g. jnp.bfloat16) once in HBM for a
    full-rate bf16 MXU matmul with f32 accumulation.
    """
    orig_shape = x.shape
    d_in = orig_shape[-1]
    d_out = weight.shape[1]
    x2 = x.reshape(-1, d_in)

    if matmul_dtype is not None:
        weight = weight.astype(matmul_dtype)

    gamma2 = gamma.reshape(1, d_in)
    beta2 = beta.reshape(1, d_in)
    bias2 = bias.reshape(1, d_out)

    try:
        out2 = _run(x2, gamma2, beta2, weight, bias2,
                    row_tile=row_tile, col_tile=col_tile, fancy=True)
    except Exception:
        # Conservative fallback (no single-buffering / repack / explicit precision):
        # guarantees the kernel runs even if an optional feature fails to lower.
        out2 = _run(x2, gamma2, beta2, weight, bias2,
                    row_tile=row_tile, col_tile=col_tile, fancy=False)

    return out2.reshape(orig_shape[:-1] + (d_out,))


if __name__ == "__main__":
    # Small shapes consistent with the module: sequence features -> hidden.
    B, S, D_IN, D_OUT = 2, 8, 32, 32

    key = jax.random.PRNGKey(0)
    kx, kw, kb = jax.random.split(key, 3)

    x = jax.random.normal(kx, (B, S, D_IN), dtype=jnp.float32)

    # Deterministic parameter init (shapes per nn.LayerNorm / nn.Linear).
    gamma = jnp.ones((D_IN,), dtype=jnp.float32)              # LayerNorm weight
    beta = jnp.zeros((D_IN,), dtype=jnp.float32)              # LayerNorm bias
    bound = 1.0 / jnp.sqrt(D_IN)
    weight = jax.random.uniform(kw, (D_IN, D_OUT), jnp.float32,
                                -bound, bound)                 # Linear weight^T
    bias = jax.random.uniform(kb, (D_OUT,), jnp.float32, -bound, bound)

    y = common_feature_extractor(x, gamma, beta, weight, bias)
    y = jax.block_until_ready(y)

    # Pure-JAX reference (f32-precise matmul so tolerances are tight).
    def ref(x):
        mu = jnp.mean(x, axis=-1, keepdims=True)
        var = jnp.mean((x - mu) ** 2, axis=-1, keepdims=True)
        xn = (x - mu) / jnp.sqrt(var + LN_EPS) * gamma + beta
        z = jnp.einsum("bsd,de->bse", xn, weight,
                       precision=jax.lax.Precision.HIGHEST) + bias
        return jnp.tanh(z)

    assert y.shape == (B, S, D_OUT)
    assert jnp.allclose(y, ref(x), atol=2e-5, rtol=1e-5), "mismatch vs JAX reference"

    print("KERNEL_OK")
</pallas_src>

<mosaic_0001>
module attributes {stable_mosaic.version = 11 : i64} {
  func.func @_cfe_kernel(%arg0: i32, %arg1: i32, %arg2: memref<16x32xf32, #tpu.memory_space<vmem>>, %arg3: memref<1x32xf32, #tpu.memory_space<vmem>>, %arg4: memref<1x32xf32, #tpu.memory_space<vmem>>, %arg5: memref<32x32xf32, #tpu.memory_space<vmem>>, %arg6: memref<1x32xf32, #tpu.memory_space<vmem>>, %arg7: memref<4x128xf32, #tpu.memory_space<vmem>>) attributes {dimension_semantics = [#tpu.dimension_semantics<parallel>, #tpu.dimension_semantics<parallel>], iteration_bounds = array<i64: 1, 1>, scalar_prefetch = 0 : i64, scratch_operands = 0 : i64, tpu.core_type = #tpu.core_type<tc>, window_params = [{transform_indices = @transform_0, window_bounds = array<i64: 16, 32>}, {pipeline_mode = #tpu.pipeline_mode<synchronous>, transform_indices = @transform_1, window_bounds = array<i64: 1, 32>}, {pipeline_mode = #tpu.pipeline_mode<synchronous>, transform_indices = @transform_2, window_bounds = array<i64: 1, 32>}, {pipeline_mode = #tpu.pipeline_mode<synchronous>, transform_indices = @transform_3, window_bounds = array<i64: 32, 32>}, {pipeline_mode = #tpu.pipeline_mode<synchronous>, transform_indices = @transform_4, window_bounds = array<i64: 1, 32>}, {transform_indices = @transform_5, window_bounds = array<i64: 4, 128>}]} {
    %c0 = arith.constant 0 : index
    %c0_0 = arith.constant 0 : index
    %0 = vector.load %arg2[%c0, %c0_0] : memref<16x32xf32, #tpu.memory_space<vmem>>, vector<16x32xf32>
    %cst = arith.constant dense<0.000000e+00> : vector<16xf32>
    %1 = vector.multi_reduction <add>, %0, %cst [1] : vector<16x32xf32> to vector<16xf32>
    %2 = vector.shape_cast %1 : vector<16xf32> to vector<16x1xf32>
    %cst_1 = arith.constant 3.200000e+01 : f32
    %3 = vector.broadcast %cst_1 : f32 to vector<16x1xf32>
    %4 = arith.divf %2, %3 : vector<16x1xf32>
    %5 = vector.broadcast %4 : vector<16x1xf32> to vector<16x32xf32>
    %6 = arith.subf %0, %5 : vector<16x32xf32>
    %7 = arith.mulf %6, %6 : vector<16x32xf32>
    %cst_2 = arith.constant dense<0.000000e+00> : vector<16xf32>
    %8 = vector.multi_reduction <add>, %7, %cst_2 [1] : vector<16x32xf32> to vector<16xf32>
    %9 = vector.shape_cast %8 : vector<16xf32> to vector<16x1xf32>
    %cst_3 = arith.constant 3.200000e+01 : f32
    %10 = vector.broadcast %cst_3 : f32 to vector<16x1xf32>
    %11 = arith.divf %9, %10 : vector<16x1xf32>
    %cst_4 = arith.constant 9.99999974E-6 : f32
    %12 = vector.broadcast %cst_4 : f32 to vector<16x1xf32>
    %13 = arith.addf %11, %12 : vector<16x1xf32>
    %14 = math.rsqrt %13 : vector<16x1xf32>
    %15 = vector.broadcast %14 : vector<16x1xf32> to vector<16x32xf32>
    %16 = arith.mulf %6, %15 : vector<16x32xf32>
    %c0_5 = arith.constant 0 : index
    %c0_6 = arith.constant 0 : index
    %17 = vector.load %arg3[%c0_5, %c0_6] : memref<1x32xf32, #tpu.memory_space<vmem>>, vector<1x32xf32>
    %18 = vector.broadcast %17 : vector<1x32xf32> to vector<16x32xf32>
    %19 = arith.mulf %16, %18 : vector<16x32xf32>
    %c0_7 = arith.constant 0 : index
    %c0_8 = arith.constant 0 : index
    %20 = vector.load %arg4[%c0_7, %c0_8] : memref<1x32xf32, #tpu.memory_space<vmem>>, vector<1x32xf32>
    %21 = vector.broadcast %20 : vector<1x32xf32> to vector<16x32xf32>
    %22 = arith.addf %19, %21 : vector<16x32xf32>
    %c0_9 = arith.constant 0 : index
    %c0_10 = arith.constant 0 : index
    %23 = vector.load %arg5[%c0_9, %c0_10] : memref<32x32xf32, #tpu.memory_space<vmem>>, vector<32x32xf32>
    %cst_11 = arith.constant dense<0.000000e+00> : vector<16x32xf32>
    %24 = tpu.matmul %22, %23, %cst_11 {dimension_numbers = #tpu.dot_dimension_numbers<[1], [0], [0], [1], [0, 0, 1, 1], [], []>, precision = #tpu.contract_precision<fp32>} : vector<16x32xf32>, vector<32x32xf32>, vector<16x32xf32> -> vector<16x32xf32>
    %c0_12 = arith.constant 0 : index
    %c0_13 = arith.constant 0 : index
    %25 = vector.load %arg6[%c0_12, %c0_13] : memref<1x32xf32, #tpu.memory_space<vmem>>, vector<1x32xf32>
    %26 = vector.broadcast %25 : vector<1x32xf32> to vector<16x32xf32>
    %27 = arith.addf %24, %26 : vector<16x32xf32>
    %28 = math.tanh %27 : vector<16x32xf32>
    %29 = vector.shape_cast %28 : vector<16x32xf32> to vector<4x128xf32>
    %c0_14 = arith.constant 0 : index
    %c0_15 = arith.constant 0 : index
    %30 = vector.load %arg7[%c0_14, %c0_15] : memref<4x128xf32, #tpu.memory_space<vmem>>, vector<4x128xf32>
    tpu.vector_store %arg7[%c0_14, %c0_15], %29 {strides = array<i32>} : memref<4x128xf32, #tpu.memory_space<vmem>>, vector<4x128xf32>,
    return
  }
  func.func @transform_0(%arg0: i32, %arg1: i32) -> (i32, i32) {
    %c0_i32 = arith.constant 0 : i32
    %c0_i32_0 = arith.constant 0 : i32
    return %arg0, %c0_i32 : i32, i32
  }
  func.func @transform_1(%arg0: i32, %arg1: i32) -> (i32, i32) {
    %c0_i32 = arith.constant 0 : i32
    %c0_i32_0 = arith.constant 0 : i32
    %c0_i32_1 = arith.constant 0 : i32
    return %c0_i32, %c0_i32_0 : i32, i32
  }
  func.func @transform_2(%arg0: i32, %arg1: i32) -> (i32, i32) {
    %c0_i32 = arith.constant 0 : i32
    %c0_i32_0 = arith.constant 0 : i32
    %c0_i32_1 = arith.constant 0 : i32
    return %c0_i32, %c0_i32_0 : i32, i32
  }
  func.func @transform_3(%arg0: i32, %arg1: i32) -> (i32, i32) {
    %c0_i32 = arith.constant 0 : i32
    %c0_i32_0 = arith.constant 0 : i32
    return %c0_i32, %arg1 : i32, i32
  }
  func.func @transform_4(%arg0: i32, %arg1: i32) -> (i32, i32) {
    %c0_i32 = arith.constant 0 : i32
    %c0_i32_0 = arith.constant 0 : i32
    return %c0_i32, %arg1 : i32, i32
  }
  func.func @transform_5(%arg0: i32, %arg1: i32) -> (i32, i32) {
    %c0_i32 = arith.constant 0 : i32
    return %arg0, %arg1 : i32, i32
  }
}

module attributes {stable_mosaic.version = 11 : i64} {
  func.func @_cfe_kernel(%arg0: i32, %arg1: i32, %arg2: memref<16x32xf32, #tpu.memory_space<vmem>>, %arg3: memref<1x32xf32, #tpu.memory_space<vmem>>, %arg4: memref<1x32xf32, #tpu.memory_space<vmem>>, %arg5: memref<32x32xf32, #tpu.memory_space<vmem>>, %arg6: memref<1x32xf32, #tpu.memory_space<vmem>>, %arg7: memref<16x32xf32, #tpu.memory_space<vmem>>) attributes {dimension_semantics = [#tpu.dimension_semantics<parallel>, #tpu.dimension_semantics<parallel>], iteration_bounds = array<i64: 1, 1>, scalar_prefetch = 0 : i64, scratch_operands = 0 : i64, tpu.core_type = #tpu.core_type<tc>, window_params = [{transform_indices = @transform_0, window_bounds = array<i64: 16, 32>}, {pipeline_mode = #tpu.pipeline_mode<synchronous>, transform_indices = @transform_1, window_bounds = array<i64: 1, 32>}, {pipeline_mode = #tpu.pipeline_mode<synchronous>, transform_indices = @transform_2, window_bounds = array<i64: 1, 32>}, {transform_indices = @transform_3, window_bounds = array<i64: 32, 32>}, {transform_indices = @transform_4, window_bounds = array<i64: 1, 32>}, {transform_indices = @transform_5, window_bounds = array<i64: 16, 32>}]} {
    %c0 = arith.constant 0 : index
    %c0_0 = arith.constant 0 : index
    %0 = vector.load %arg2[%c0, %c0_0] : memref<16x32xf32, #tpu.memory_space<vmem>>, vector<16x32xf32>
    %cst = arith.constant dense<0.000000e+00> : vector<16xf32>
    %1 = vector.multi_reduction <add>, %0, %cst [1] : vector<16x32xf32> to vector<16xf32>
    %2 = vector.shape_cast %1 : vector<16xf32> to vector<16x1xf32>
    %cst_1 = arith.constant 3.200000e+01 : f32
    %3 = vector.broadcast %cst_1 : f32 to vector<16x1xf32>
    %4 = arith.divf %2, %3 : vector<16x1xf32>
    %5 = vector.broadcast %4 : vector<16x1xf32> to vector<16x32xf32>
    %6 = arith.subf %0, %5 : vector<16x32xf32>
    %7 = arith.mulf %6, %6 : vector<16x32xf32>
    %cst_2 = arith.constant dense<0.000000e+00> : vector<16xf32>
    %8 = vector.multi_reduction <add>, %7, %cst_2 [1] : vector<16x32xf32> to vector<16xf32>
    %9 = vector.shape_cast %8 : vector<16xf32> to vector<16x1xf32>
    %cst_3 = arith.constant 3.200000e+01 : f32
    %10 = vector.broadcast %cst_3 : f32 to vector<16x1xf32>
    %11 = arith.divf %9, %10 : vector<16x1xf32>
    %cst_4 = arith.constant 9.99999974E-6 : f32
    %12 = vector.broadcast %cst_4 : f32 to vector<16x1xf32>
    %13 = arith.addf %11, %12 : vector<16x1xf32>
    %14 = math.rsqrt %13 : vector<16x1xf32>
    %15 = vector.broadcast %14 : vector<16x1xf32> to vector<16x32xf32>
    %16 = arith.mulf %6, %15 : vector<16x32xf32>
    %c0_5 = arith.constant 0 : index
    %c0_6 = arith.constant 0 : index
    %17 = vector.load %arg3[%c0_5, %c0_6] : memref<1x32xf32, #tpu.memory_space<vmem>>, vector<1x32xf32>
    %18 = vector.broadcast %17 : vector<1x32xf32> to vector<16x32xf32>
    %19 = arith.mulf %16, %18 : vector<16x32xf32>
    %c0_7 = arith.constant 0 : index
    %c0_8 = arith.constant 0 : index
    %20 = vector.load %arg4[%c0_7, %c0_8] : memref<1x32xf32, #tpu.memory_space<vmem>>, vector<1x32xf32>
    %21 = vector.broadcast %20 : vector<1x32xf32> to vector<16x32xf32>
    %22 = arith.addf %19, %21 : vector<16x32xf32>
    %c0_9 = arith.constant 0 : index
    %c0_10 = arith.constant 0 : index
    %23 = vector.load %arg5[%c0_9, %c0_10] : memref<32x32xf32, #tpu.memory_space<vmem>>, vector<32x32xf32>
    %cst_11 = arith.constant dense<0.000000e+00> : vector<16x32xf32>
    %24 = tpu.matmul %22, %23, %cst_11 {dimension_numbers = #tpu.dot_dimension_numbers<[1], [0], [0], [1], [0, 0, 1, 1], [], []>} : vector<16x32xf32>, vector<32x32xf32>, vector<16x32xf32> -> vector<16x32xf32>
    %c0_12 = arith.constant 0 : index
    %c0_13 = arith.constant 0 : index
    %25 = vector.load %arg6[%c0_12, %c0_13] : memref<1x32xf32, #tpu.memory_space<vmem>>, vector<1x32xf32>
    %26 = vector.broadcast %25 : vector<1x32xf32> to vector<16x32xf32>
    %27 = arith.addf %24, %26 : vector<16x32xf32>
    %28 = math.tanh %27 : vector<16x32xf32>
    %c0_14 = arith.constant 0 : index
    %c0_15 = arith.constant 0 : index
    %29 = vector.load %arg7[%c0_14, %c0_15] : memref<16x32xf32, #tpu.memory_space<vmem>>, vector<16x32xf32>
    tpu.vector_store %arg7[%c0_14, %c0_15], %28 {strides = array<i32>} : memref<16x32xf32, #tpu.memory_space<vmem>>, vector<16x32xf32>,
    return
  }
  func.func @transform_0(%arg0: i32, %arg1: i32) -> (i32, i32) {
    %c0_i32 = arith.constant 0 : i32
    %c0_i32_0 = arith.constant 0 : i32
    return %arg0, %c0_i32 : i32, i32
  }
  func.func @transform_1(%arg0: i32, %arg1: i32) -> (i32, i32) {
    %c0_i32 = arith.constant 0 : i32
    %c0_i32_0 = arith.constant 0 : i32
    %c0_i32_1 = arith.constant 0 : i32
    return %c0_i32, %c0_i32_0 : i32, i32
  }
  func.func @transform_2(%arg0: i32, %arg1: i32) -> (i32, i32) {
    %c0_i32 = arith.constant 0 : i32
    %c0_i32_0 = arith.constant 0 : i32
    %c0_i32_1 = arith.constant 0 : i32
    return %c0_i32, %c0_i32_0 : i32, i32
  }
  func.func @transform_3(%arg0: i32, %arg1: i32) -> (i32, i32) {
    %c0_i32 = arith.constant 0 : i32
    %c0_i32_0 = arith.constant 0 : i32
    return %c0_i32, %arg1 : i32, i32
  }
  func.func @transform_4(%arg0: i32, %arg1: i32) -> (i32, i32) {
    %c0_i32 = arith.constant 0 : i32
    %c0_i32_0 = arith.constant 0 : i32
    return %c0_i32, %arg1 : i32, i32
  }
  func.func @transform_5(%arg0: i32, %arg1: i32) -> (i32, i32) {
    %c0_i32 = arith.constant 0 : i32
    return %arg0, %arg1 : i32, i32
  }
}

</mosaic_0001>

<llo_original>
// kernel: tpu_custom_call.1
$region0: #{tpu_custom_call.1}
  #allocation0 [shape = 'u32[]', space=smem, size = 0x4, offset = 0x4, fixed_abs, tag = 'smem constant byte address 0x4 - core index']
  #allocation1 [shape = 'u32[144,128]{1,0:T(1,128)}', space=vmem, size = 0x12000, scoped, tag = 'internal scratch']
  %s0 = inlined_call_operand.hbm [shape: f32[16,32], index: 0, kind: input, shape index: {}]
  %s1 = inlined_call_operand.vmem [shape: f32[1,32], index: 1, kind: input, shape index: {}]
  %s2 = inlined_call_operand.vmem [shape: f32[1,32], index: 2, kind: input, shape index: {}]
  %s3 = inlined_call_operand.hbm [shape: f32[32,32], index: 3, kind: input, shape index: {}]
  %s4 = inlined_call_operand.vmem [shape: f32[1,32], index: 4, kind: input, shape index: {}]
  %s5 = inlined_call_operand.hbm [shape: f32[16,32], index: 5, kind: output, shape index: {}]
  %s6 = sld [smem:[#allocation0]]
  $region38: #{tpu_custom_call.1} parent=0
    _
  %s8 = ssub.s32 1, %s6
  %s9 = scalar_select 0, %s8, %s6
  $region1: #{tpu_custom_call.1} parent=0
    #allocation2 [shape = 'u8[8192]{0}', space=vmem, size = 0x2000, scoped, tag = 'input window, operand 0, single buffered']
    #allocation3 [shape = 's32[1]{0}', space=sflag, size = 0x4, scoped, tag = 'scoped memory for tpu_custom_call.1']
    #allocation4 [shape = 's32[1]{0}', space=sflag, size = 0x4, scoped, tag = 'scoped memory for tpu_custom_call.1']
    #allocation5 [shape = 'u8[16384]{0}', space=vmem, size = 0x4000, scoped, tag = 'input window, operand 3, single buffered']
    #allocation6 [shape = 's32[1]{0}', space=sflag, size = 0x4, scoped, tag = 'scoped memory for tpu_custom_call.1']
    #allocation7 [shape = 'u8[8192]{0}', space=vmem, size = 0x2000, scoped, tag = 'output window, operand 0, single buffered']
    %10 = vsyncpa [#allocation3], 0
    %11 = vsyncpa [#allocation6], 0
    %12 = vsyncpa [#allocation4], 0
    // Predicated region
    $region2: #{tpu_custom_call.1} parent=1 // pred_check
      _
    $region3: #{tpu_custom_call.1} parent=1 // pred_check_branch
      %14 = sbr.rel (0) target = $region5
    $region4: #{tpu_custom_call.1} parent=1 // pred_region
      %s16 = ssub.s32 256, 256
      %17 = vsyncadd [#allocation3], %s16
      %s18 = sshll.u32 [#allocation2], 4
      %s19 = int_to_ptr.vmem [resolvable:$true] %s18
      %24 = dma.hbm_to_vmem [thread:$0]  %s0, 256, %s19, [#allocation3], 128, 128, 8
    $region5: #{tpu_custom_call.1} parent=1 // pred_fallthru
      _
    // Predicated region
    $region6: #{tpu_custom_call.1} parent=1 // pred_check
      _
    $region7: #{tpu_custom_call.1} parent=1 // pred_check_branch
      %26 = sbr.rel (0) target = $region9
    $region8: #{tpu_custom_call.1} parent=1 // pred_region
      _
    $region9: #{tpu_custom_call.1} parent=1 // pred_fallthru
      _
    // Predicated region
    $region10: #{tpu_custom_call.1} parent=1 // pred_check
      _
    $region11: #{tpu_custom_call.1} parent=1 // pred_check_branch
      %28 = sbr.rel (0) target = $region13
    $region12: #{tpu_custom_call.1} parent=1 // pred_region
      _
    $region13: #{tpu_custom_call.1} parent=1 // pred_fallthru
      _
    // Predicated region
    $region14: #{tpu_custom_call.1} parent=1 // pred_check
      _
    $region15: #{tpu_custom_call.1} parent=1 // pred_check_branch
      %30 = sbr.rel (0) target = $region17
    $region16: #{tpu_custom_call.1} parent=1 // pred_region
      %s32 = ssub.s32 512, 512
      %33 = vsyncadd [#allocation6], %s32
      %s34 = sshll.u32 [#allocation5], 4
      %s35 = int_to_ptr.vmem [resolvable:$true] %s34
      %40 = dma.hbm_to_vmem [thread:$0]  %s3, 512, %s35, [#allocation6], 128, 128, 8
    $region17: #{tpu_custom_call.1} parent=1 // pred_fallthru
      _
    // Predicated region
    $region18: #{tpu_custom_call.1} parent=1 // pred_check
      _
    $region19: #{tpu_custom_call.1} parent=1 // pred_check_branch
      %42 = sbr.rel (0) target = $region21
    $region20: #{tpu_custom_call.1} parent=1 // pred_region
      _
    $region21: #{tpu_custom_call.1} parent=1 // pred_fallthru
      _
    // Predicated region
    $region22: #{tpu_custom_call.1} parent=1 // pred_check
      _
    $region23: #{tpu_custom_call.1} parent=1 // pred_check_branch
      %44 = sbr.rel (0) target = $region25
    $region24: #{tpu_custom_call.1} parent=1 // pred_region
      %45 = dma.done [#allocation3], 256
    $region25: #{tpu_custom_call.1} parent=1 // pred_fallthru
      _
    // Predicated region
    $region26: #{tpu_custom_call.1} parent=1 // pred_check
      _
    $region27: #{tpu_custom_call.1} parent=1 // pred_check_branch
      %47 = sbr.rel (0) target = $region29
    $region28: #{tpu_custom_call.1} parent=1 // pred_region
      %48 = dma.done [#allocation6], 512
    $region29: #{tpu_custom_call.1} parent=1 // pred_fallthru
      _
    %v49 = vld [vmem:[#allocation2] sm:$0xff]
    %v50 = vld [vmem:[#allocation2 + $0x8] sm:$0xff]
    %vm51 = vcmask 261120
    %v52 = vsel %vm51, %v49, 0.0
    %53 = vadd.xlane.f32.xlu0 %v52
    %v54 = vpop.xlane.xlu0 %53
    %v55 = vsel %vm51, %v50, 0.0
    %56 = vadd.xlane.f32.xlu0 %v55
    %v57 = vpop.xlane.xlu0 %56
    %v58 = vrcp.pop 32.0
    %v59 = vmul.f32 %v54, %v58
    %v60 = vmul.f32 %v57, %v58
    %v61 = vsub.f32 %v49, %v59
    %v62 = vsub.f32 %v50, %v60
    %v63 = vmul.f32 %v61, %v61
    %v64 = vmul.f32 %v62, %v62
    %v65 = vsel %vm51, %v63, 0.0
    %66 = vadd.xlane.f32.xlu0 %v65
    %v67 = vpop.xlane.xlu0 %66
    %v68 = vsel %vm51, %v64, 0.0
    %69 = vadd.xlane.f32.xlu0 %v68
    %v70 = vpop.xlane.xlu0 %69
    %v71 = vmul.f32 %v67, %v58
    %v72 = vmul.f32 %v70, %v58
    %v73 = vadd.f32 %v71, 1e-05
    %v74 = vadd.f32 %v72, 1e-05
    %v75 = vrsqrt.pop %v73
    %v76 = vrsqrt.pop %v74
    %v77 = vmul.f32 %v61, %v75
    %v78 = vmul.f32 %v62, %v76
    %v79 = vld [vmem:[%s1] sm:$0x1]
    %v81 = vlaneseq
    %v82 = vshrl.u32 %v81, 7
    %v83 = vsub.s32 0, %v82
    %v84 = vrot.slane %v79, %v83
    %v86 = vmul.f32 %v77, %v84
    %v87 = vmul.f32 %v78, %v84
    %v88 = vld [vmem:[%s2] sm:$0x1]
    %v90 = vlaneseq
    %v91 = vshrl.u32 %v90, 7
    %v92 = vsub.s32 0, %v91
    %v93 = vrot.slane %v88, %v92
    %v95 = vadd.f32 %v86, %v93
    %v96 = vadd.f32 %v87, %v93
    %v97 = vld [vmem:[#allocation5] sm:$0xff]
    %v98 = vld [vmem:[#allocation5 + $0x8] sm:$0xff]
    %v99 = vld [vmem:[#allocation5 + $0x10] sm:$0xff]
    %v100 = vld [vmem:[#allocation5 + $0x18] sm:$0xff]
    %v101 = vld [vmem:[%s4] sm:$0x1]
    %v103 = vlaneseq
    %v104 = vshrl.u32 %v103, 7
    %v105 = vsub.s32 0, %v104
    %v106 = vrot.slane %v101, %v105
    %v109 = vsel %vm51, %v95, 0
    %v112 = vsel %vm51, %v96, 0
    %114 = vmatprep.subr.mxu0 0.0
    %115 = vmatpush1.msra.mxu0 %v97
    %116 = vmatprep.subr.mxu0 0.0
    %117 = vmatpush1.msra.mxu0 %v98
    %118 = vmatprep.subr.mxu0 0.0
    %119 = vmatpush1.msra.mxu0 %v99
    %120 = vmatprep.subr.mxu0 0.0
    %121 = vmatpush1.msra.mxu0 %v100
    %122 = vmatprep.subr.mxu0 0.0
    %123 = vmatpush1.msra.mxu0 0.0
    %124 = vmatprep.subr.mxu0 0.0
    %125 = vmatpush1.msra.mxu0 0.0
    %126 = vmatprep.subr.mxu0 0.0
    %127 = vmatpush1.msra.mxu0 0.0
    %128 = vmatprep.subr.mxu0 0.0
    %129 = vmatpush1.msra.mxu0 0.0
    %130 = vmatprep.subr.mxu0 0.0
    %131 = vmatpush1.msra.mxu0 0.0
    %132 = vmatprep.subr.mxu0 0.0
    %133 = vmatpush1.msra.mxu0 0.0
    %134 = vmatprep.subr.mxu0 0.0
    %135 = vmatpush1.msra.mxu0 0.0
    %136 = vmatprep.subr.mxu0 0.0
    %137 = vmatpush1.msra.mxu0 0.0
    %138 = vmatprep.subr.mxu0 0.0
    %139 = vmatpush1.msra.mxu0 0.0
    %140 = vmatprep.subr.mxu0 0.0
    %141 = vmatpush1.msra.mxu0 0.0
    %142 = vmatprep.subr.mxu0 0.0
    %143 = vmatpush1.msra.mxu0 0.0
    %144 = vmatprep.subr.mxu0 0.0
    %145 = vmatpush1.msra.mxu0 0.0
    %146 = vmatprep.subr.mxu0 0.0
    %147 = vmatpush1.msra.mxu0 0.0
    %148 = vmatprep.subr.mxu0 0.0
    %149 = vmatpush1.msra.mxu0 0.0
    %150 = vmatprep.subr.mxu0 0.0
    %151 = vmatpush1.msra.mxu0 0.0
    %152 = vmatprep.subr.mxu0 0.0
    %153 = vmatpush1.msra.mxu0 0.0
    %154 = vmatprep.subr.mxu0 0.0
    %155 = vmatpush1.msra.mxu0 0.0
    %156 = vmatprep.subr.mxu0 0.0
    %157 = vmatpush1.msra.mxu0 0.0
    %158 = vmatprep.subr.mxu0 0.0
    %159 = vmatpush1.msra.mxu0 0.0
    %160 = vmatprep.subr.mxu0 0.0
    %161 = vmatpush1.msra.mxu0 0.0
    %162 = vmatprep.subr.mxu0 0.0
    %163 = vmatpush1.msra.mxu0 0.0
    %164 = vmatprep.subr.mxu0 0.0
    %165 = vmatpush1.msra.mxu0 0.0
    %166 = vmatprep.subr.mxu0 0.0
    %167 = vmatpush1.msra.mxu0 0.0
    %168 = vmatprep.subr.mxu0 0.0
    %169 = vmatpush1.msra.mxu0 0.0
    %170 = vmatprep.subr.mxu0 0.0
    %171 = vmatpush1.msra.mxu0 0.0
    %172 = vmatprep.subr.mxu0 0.0
    %173 = vmatpush1.msra.mxu0 0.0
    %174 = vmatprep.subr.mxu0 0.0
    %175 = vmatpush1.msra.mxu0 0.0
    %176 = vmatprep.subr.mxu0 0.0
    %177 = vmatpush1.msra.mxu0 0.0
    %178 = vmatprep.mubr.f32.mxu0 0.0
    %179 = vmatmul.mubr.f32.gmra.mrb[0].mxu0 %v109
    %v180 = vpop.f32.mrb[0].mxu0
    %v181 = vadd.f32 %v106, %v180
    %v182 = vpop.f32.mrb[0].mxu0
    %183 = vmatprep.mubr.f32.mxu0 0.0
    %184 = vmatmul.mubr.f32.gmra.mrb[0].mxu0 %v112
    %v185 = vpop.f32.mrb[0].mxu0
    %v186 = vadd.f32 %v106, %v185
    %v187 = vpop.f32.mrb[0].mxu0
    %188 = vdwg.mxu0
    %v189 = vtanh.pop %v181
    %v190 = vtanh.pop %v186
    %191 = vst.msk [vmem:[#allocation7] sm:$0xff] %vm51, %v189
    %192 = vst.msk [vmem:[#allocation7 + $0x8] sm:$0xff] %vm51, %v190
    // Predicated region
    $region30: #{tpu_custom_call.1} parent=1 // pred_check
      _
    $region31: #{tpu_custom_call.1} parent=1 // pred_check_branch
      %194 = sbr.rel (0) target = $region33
    $region32: #{tpu_custom_call.1} parent=1 // pred_region
      %s196 = ssub.s32 256, 256
      %197 = vsyncadd [#allocation4], %s196
      %s198 = sshll.u32 [#allocation7], 4
      %s199 = int_to_ptr.vmem [resolvable:$true] %s198
      %204 = dma.vmem_to_hbm [thread:$0]  %s199, 256, %s5, [#allocation4], 128, 128, 8
    $region33: #{tpu_custom_call.1} parent=1 // pred_fallthru
      _
    // Predicated region
    $region34: #{tpu_custom_call.1} parent=1 // pred_check
      _
    $region35: #{tpu_custom_call.1} parent=1 // pred_check_branch
      %206 = sbr.rel (0) target = $region37
    $region36: #{tpu_custom_call.1} parent=1 // pred_region
      %207 = dma.done [#allocation4], 256
    $region37: #{tpu_custom_call.1} parent=1 // pred_fallthru
      _
    %208 = vsyncpa [#allocation3], 1
    %209 = vsyncpa [#allocation6], 1
    %210 = vsyncpa [#allocation4], 1

</llo_original>
